<compile_context>
chip_gen: v5e
topology: v5e:2x2
jax: 0.10.0
libtpu: 0.0.40
codegen_flags: <defaults>
</compile_context>

<pallas_src>
import functools

import jax
import jax.numpy as jnp
from jax.experimental import pallas as pl
from jax.experimental.pallas import tpu as pltpu

SEQ_LEN = 64  # fixed by the module (torch.arange(64))


@functools.lru_cache(maxsize=None)
def build_pe_table(d_model):
    """(64, d_model) sinusoidal table; mirrors the PyTorch __init__ exactly."""
    assert d_model % 2 == 0, "AbsolutePositionalEncoder requires even d_model"
    position = jnp.arange(SEQ_LEN, dtype=jnp.float32)[:, None]          # (64, 1)
    _2i = jnp.arange(0, d_model, 2, dtype=jnp.float32)                   # (d/2,)
    div = jnp.float32(10000.0) ** (_2i / jnp.float32(d_model))
    angles = position / div                                              # (64, d/2)
    # interleave [sin0, cos0, sin1, cos1, ...] along the feature axis
    pe = jnp.stack([jnp.sin(angles), jnp.cos(angles)], axis=-1)          # (64, d/2, 2)
    return pe.reshape(SEQ_LEN, d_model)


def _broadcast_pe_kernel(pe_ref, o_ref):
    # pe_ref: (S_blk, F_blk) VMEM-resident table block (constant block index)
    # o_ref : (b_tile, S_blk, F_blk) output block
    o_ref[...] = jnp.broadcast_to(pe_ref[...][None, :, :], o_ref.shape)


def _pick_b_tile(batch, row_bytes, target_bytes):
    """Largest batch tile giving ~target_bytes output blocks, preferring a
    divisor of batch (so the last block is never a masked partial store)."""
    cap = max(1, min(batch, target_bytes // row_bytes))
    for bt in range(cap, max(1, cap // 2) - 1, -1):
        if batch % bt == 0:
            return bt
    return cap


def absolute_positional_encoder(x, d_model):
    """Mirror of AbsolutePositionalEncoder(d_model).forward(x).

    x: (batch, seq, feat) -- only the batch size is used (as in the module).
    returns: (batch, 64, d_model) float32 positional-encoding table.
    """
    assert d_model % 2 == 0, "even d_model required (matches torch semantics)"
    batch = x.shape[0]
    pe = build_pe_table(d_model)                       # (64, d_model), built once

    # Lane/sublane-dense kernel view of the table.
    if d_model % 128 == 0:
        S, F = SEQ_LEN, d_model                        # natural (64, d_model)
    else:
        F = 128                                        # flat lane-dense view
        S = SEQ_LEN * d_model // 128                   # 64*d_model % 128 == 0 (even d)
    pe_view = pe.reshape(S, F)                         # row-major, free

    row_bytes = S * F * 4
    b_tile = _pick_b_tile(batch, row_bytes, target_bytes=6 << 20)
    grid_b = pl.cdiv(batch, b_tile)

    # If the whole batch fits in one block, split features so both v7x TCs work.
    n_f = 2 if (grid_b == 1 and F % 256 == 0) else 1
    f_tile = F // n_f

    out_block_bytes = b_tile * S * f_tile * 4
    tbl_block_bytes = S * f_tile * 4
    vmem_limit = int(min(
        64 << 20,
        max(2 * out_block_bytes + 2 * tbl_block_bytes + (2 << 20), 16 << 20)))

    out = pl.pallas_call(
        _broadcast_pe_kernel,
        out_shape=jax.ShapeDtypeStruct((batch, S, F), jnp.float32),
        grid_spec=pltpu.PrefetchScalarGridSpec(
            num_scalar_prefetch=0,
            grid=(grid_b, n_f),
            in_specs=[pl.BlockSpec((S, f_tile), lambda b, f: (0, f))],
            out_specs=pl.BlockSpec((b_tile, S, f_tile), lambda b, f: (b, 0, f)),
        ),
        compiler_params=pltpu.CompilerParams(
            dimension_semantics=("parallel", "parallel"),
            vmem_limit_bytes=vmem_limit,
        ),
        cost_estimate=pl.CostEstimate(
            flops=0,
            transcendentals=0,
            bytes_accessed=(batch * S * F + grid_b * n_f * S * f_tile) * 4,
        ),
    )(pe_view)

    # Row-major reshape back to the module's (batch, 64, d_model) layout — free.
    return out.reshape(batch, SEQ_LEN, d_model)


def _reference(x, d_model):
    """Pure-JAX reference reproducing the PyTorch __init__ + forward."""
    batch_size = x.shape[0]
    position = jnp.arange(SEQ_LEN, dtype=jnp.float32)[:, None]
    _2i = jnp.arange(0, d_model, 2, dtype=jnp.float32)
    div = jnp.float32(10000.0) ** (_2i / jnp.float32(d_model))
    pe = jnp.zeros((1, SEQ_LEN, d_model), jnp.float32)
    pe = pe.at[:, :, 0::2].set(jnp.sin(position / div))
    pe = pe.at[:, :, 1::2].set(jnp.cos(position / div))
    return jnp.broadcast_to(pe, (batch_size, SEQ_LEN, d_model))


if __name__ == "__main__":
    key = jax.random.PRNGKey(0)

    # Small shape: exercises the flat lane-dense path (d_model < 128).
    batch, seq, d_small = 2, 8, 32
    x_small = jax.random.normal(key, (batch, seq, d_small), dtype=jnp.float32)
    out_small = jax.block_until_ready(
        absolute_positional_encoder(x_small, d_small))
    ref_small = _reference(x_small, d_small)
    assert out_small.shape == (batch, SEQ_LEN, d_small), out_small.shape
    assert jnp.allclose(out_small, ref_small, atol=1e-5, rtol=1e-5), \
        "mismatch vs reference (d_model=32)"

    # Spec-sized d_model: 3-D blocks + feature split (both TCs on v7x).
    batch2, d_full = 4, 512
    x_full = jax.random.normal(key, (batch2, seq, d_full), dtype=jnp.float32)
    out_full = jax.block_until_ready(
        absolute_positional_encoder(x_full, d_full))
    ref_full = _reference(x_full, d_full)
    assert out_full.shape == (batch2, SEQ_LEN, d_full), out_full.shape
    assert jnp.allclose(out_full, ref_full, atol=1e-5, rtol=1e-5), \
        "mismatch vs reference (d_model=512)"

    print("KERNEL_OK")
</pallas_src>

<mosaic_0001>
module attributes {stable_mosaic.version = 11 : i64} {
  func.func @_broadcast_pe_kernel(%arg0: i32, %arg1: i32, %arg2: memref<16x128xf32, #tpu.memory_space<vmem>>, %arg3: memref<2x16x128xf32, #tpu.memory_space<vmem>>) attributes {dimension_semantics = [#tpu.dimension_semantics<parallel>, #tpu.dimension_semantics<parallel>], iteration_bounds = array<i64: 1, 1>, scalar_prefetch = 0 : i64, scratch_operands = 0 : i64, tpu.core_type = #tpu.core_type<tc>, window_params = [{transform_indices = @transform_0, window_bounds = array<i64: 16, 128>}, {transform_indices = @transform_1, window_bounds = array<i64: 2, 16, 128>}]} {
    %c0 = arith.constant 0 : index
    %c0_0 = arith.constant 0 : index
    %0 = vector.load %arg2[%c0, %c0_0] : memref<16x128xf32, #tpu.memory_space<vmem>>, vector<16x128xf32>
    %1 = vector.shape_cast %0 : vector<16x128xf32> to vector<1x16x128xf32>
    %2 = vector.shape_cast %1 : vector<1x16x128xf32> to vector<1x16x128xf32>
    %3 = vector.broadcast %2 : vector<1x16x128xf32> to vector<2x16x128xf32>
    %c0_1 = arith.constant 0 : index
    %c0_2 = arith.constant 0 : index
    %c0_3 = arith.constant 0 : index
    %4 = vector.load %arg3[%c0_1, %c0_2, %c0_3] : memref<2x16x128xf32, #tpu.memory_space<vmem>>, vector<2x16x128xf32>
    tpu.vector_store %arg3[%c0_1, %c0_2, %c0_3], %3 {strides = array<i32>} : memref<2x16x128xf32, #tpu.memory_space<vmem>>, vector<2x16x128xf32>,
    return
  }
  func.func @transform_0(%arg0: i32, %arg1: i32) -> (i32, i32) {
    %c0_i32 = arith.constant 0 : i32
    %c0_i32_0 = arith.constant 0 : i32
    return %c0_i32, %arg1 : i32, i32
  }
  func.func @transform_1(%arg0: i32, %arg1: i32) -> (i32, i32, i32) {
    %c0_i32 = arith.constant 0 : i32
    %c0_i32_0 = arith.constant 0 : i32
    return %arg0, %c0_i32, %arg1 : i32, i32, i32
  }
}

</mosaic_0001>

<llo_original>
// kernel: tpu_custom_call.1
$region0: #{tpu_custom_call.1}
  #allocation0 [shape = 'u32[]', space=smem, size = 0x4, offset = 0x4, fixed_abs, tag = 'smem constant byte address 0x4 - core index']
  #allocation1 [shape = 'u32[72,128]{1,0:T(1,128)}', space=vmem, size = 0x9000, scoped, tag = 'internal scratch']
  %s0 = inlined_call_operand.hbm [shape: f32[16,128], index: 0, kind: input, shape index: {}]
  %s1 = inlined_call_operand.hbm [shape: f32[2,16,128], index: 1, kind: output, shape index: {}]
  %s2 = sld [smem:[#allocation0]]
  $region18: #{tpu_custom_call.1} parent=0
    _
  %s4 = ssub.s32 1, %s2
  %s5 = scalar_select 0, %s4, %s2
  $region1: #{tpu_custom_call.1} parent=0
    #allocation2 [shape = 'u8[8192]{0}', space=vmem, size = 0x2000, scoped, tag = 'input window, operand 0, single buffered']
    #allocation3 [shape = 's32[1]{0}', space=sflag, size = 0x4, scoped, tag = 'scoped memory for tpu_custom_call.1']
    #allocation4 [shape = 's32[1]{0}', space=sflag, size = 0x4, scoped, tag = 'scoped memory for tpu_custom_call.1']
    #allocation5 [shape = 'u8[16384]{0}', space=vmem, size = 0x4000, scoped, tag = 'output window, operand 0, single buffered']
    %6 = vsyncpa [#allocation3], 0
    %7 = vsyncpa [#allocation4], 0
    // Predicated region
    $region2: #{tpu_custom_call.1} parent=1 // pred_check
      _
    $region3: #{tpu_custom_call.1} parent=1 // pred_check_branch
      %9 = sbr.rel (0) target = $region5
    $region4: #{tpu_custom_call.1} parent=1 // pred_region
      %11 = vsyncadd [#allocation3], 0
      %s12 = sshll.u32 %s0, 4
      %s13 = int_to_ptr.hbm [resolvable:$true] %s12
      %s14 = sshll.u32 [#allocation2], 4
      %s15 = int_to_ptr.vmem [resolvable:$true] %s14
      %20 = dma.hbm_to_vmem [thread:$0]  %s13, 256, %s15, [#allocation3], 128, 128, 8
    $region5: #{tpu_custom_call.1} parent=1 // pred_fallthru
      _
    // Predicated region
    $region6: #{tpu_custom_call.1} parent=1 // pred_check
      _
    $region7: #{tpu_custom_call.1} parent=1 // pred_check_branch
      %22 = sbr.rel (0) target = $region9
    $region8: #{tpu_custom_call.1} parent=1 // pred_region
      %24 = dma.done [#allocation3], 256
    $region9: #{tpu_custom_call.1} parent=1 // pred_fallthru
      _
    %v25 = vld [vmem:[#allocation2] sm:$0xff]
    %v26 = vld [vmem:[#allocation2 + $0x8] sm:$0xff]
    %27 = vst [vmem:[#allocation5] sm:$0xff] %v25
    %28 = vst [vmem:[#allocation5 + $0x8] sm:$0xff] %v26
    %29 = vst [vmem:[#allocation5 + $0x10] sm:$0xff] %v25
    %30 = vst [vmem:[#allocation5 + $0x18] sm:$0xff] %v26
    // Predicated region
    $region10: #{tpu_custom_call.1} parent=1 // pred_check
      _
    $region11: #{tpu_custom_call.1} parent=1 // pred_check_branch
      %32 = sbr.rel (0) target = $region13
    $region12: #{tpu_custom_call.1} parent=1 // pred_region
      %34 = vsyncadd [#allocation4], 0
      %s35 = sshll.u32 [#allocation5], 4
      %s36 = int_to_ptr.vmem [resolvable:$true] %s35
      %s37 = sshll.u32 %s1, 4
      %s38 = int_to_ptr.hbm [resolvable:$true] %s37
      %43 = dma.vmem_to_hbm [thread:$0]  %s36, 512, %s38, [#allocation4], 128, 128, 8
    $region13: #{tpu_custom_call.1} parent=1 // pred_fallthru
      _
    // Predicated region
    $region14: #{tpu_custom_call.1} parent=1 // pred_check
      _
    $region15: #{tpu_custom_call.1} parent=1 // pred_check_branch
      %45 = sbr.rel (0) target = $region17
    $region16: #{tpu_custom_call.1} parent=1 // pred_region
      %47 = dma.done [#allocation4], 512
    $region17: #{tpu_custom_call.1} parent=1 // pred_fallthru
      _
    %48 = vsyncpa [#allocation3], 1
    %49 = vsyncpa [#allocation4], 1

</llo_original>
